<compile_context>
chip_gen: v7x
topology: tpu7x:2x2x1
jax: 0.10.0
libtpu: 0.0.40
codegen_flags: <defaults>
</compile_context>

<pallas_src>
import jax
import jax.numpy as jnp
from jax.experimental import pallas as pl
from jax.experimental.pallas import tpu as pltpu

EPS = 1e-5                 # Euclidean_to_Hpyerbolic EPS
MAXNORM = 1.0 - EPS        # torch.renorm max L2 norm per row
CLAMP_MAX = 1.0 - 1e-6     # clamp inside hyper_distance
RENORM_EPS = 1e-7          # torch.renorm's internal epsilon
TINY = 1e-30               # division guard


def htransrec_kernel(user_ref, last_ref, pre_ref, bias_ref, out_ref):
    # user/last/pre: (D, TB) lane-major (batch on lanes, embed dim on sublanes);
    # bias: (1, TB) lane-dense; out: (1, TB) lane-dense.
    # global_transition is already folded into the user rows.
    t = user_ref[...].astype(jnp.float32) + last_ref[...].astype(jnp.float32) + EPS
    p = pre_ref[...].astype(jnp.float32) + EPS

    # Reductions over the embedding (sublane) axis -> lane-dense (1, TB) vregs.
    tt = jnp.sum(t * t, axis=0, keepdims=True)
    pp = jnp.sum(p * p, axis=0, keepdims=True)

    n_t = jnp.maximum(jnp.sqrt(tt), TINY)
    n_p = jnp.maximum(jnp.sqrt(pp), TINY)
    th_t = jnp.tanh(n_t)
    th_p = jnp.tanh(n_p)

    # exp_map_zero + torch.renorm:  mapped = f * v with
    #   f = scale * tanh(||v||) / ||v||,   ||mapped|| = scale * tanh(||v||)
    s_t = jnp.where(th_t > MAXNORM, MAXNORM / (th_t + RENORM_EPS), 1.0)
    s_p = jnp.where(th_p > MAXNORM, MAXNORM / (th_p + RENORM_EPS), 1.0)
    nrm_x = s_t * th_t                  # ||x||
    nrm_y = s_p * th_p                  # ||y||
    f_t = nrm_x / n_t
    f_p = nrm_y / n_p

    # ||x - y||^2 from the actual mapped vectors (no catastrophic cancellation).
    diff = f_t * t - f_p * p
    d = jnp.sum(diff * diff, axis=0, keepdims=True)

    nx = jnp.minimum(nrm_x * nrm_x, CLAMP_MAX)      # torch.clamp(.., 0, 1 - 1e-6)
    ny = jnp.minimum(nrm_y * nrm_y, CLAMP_MAX)
    arg = 1.0 + 2.0 * d / ((1.0 - nx) * (1.0 - ny))
    # cosh_neg_power == acosh; guard arg^2 - 1 against tiny-negative rounding.
    dist = jnp.log(arg + jnp.sqrt(jnp.maximum(arg * arg - 1.0, 0.0)))

    out_ref[...] = bias_ref[...] - dist


def _pick_tile_b(B, D, *, vmem_budget_bytes=12 << 20):
    """Largest lane-multiple tile that (a) divides B, (b) keeps the three
    double-buffered f32 inputs (~24*D*tile_b bytes) under the budget (safe even
    for v5e's 16 MiB default scoped VMEM), and (c) leaves >= 2 grid steps when B
    allows, so both v7x TensorCores get work."""
    if B <= 128 or B % 128 != 0:
        return B                                   # single full-array block (always legal)
    cap = max(128, (vmem_budget_bytes // (24 * D)) // 128 * 128)
    tile = min(cap, max(128, (B // 2) // 128 * 128))
    while B % tile != 0:
        tile -= 128
    return tile


def htransrec_scores(user_rows, last_rows, pre_rows, pre_bias_row, *, tile_b=None):
    """Lane-major inputs: user/last/pre rows (D, B); bias (1, B).  Returns (B,)."""
    D, B = user_rows.shape
    if tile_b is None:
        tile_b = _pick_tile_b(B, D)
    assert B % tile_b == 0, "batch must be a multiple of tile_b"
    assert tile_b == B or tile_b % 128 == 0, "tile_b must be lane-aligned or full"

    out = pl.pallas_call(
        htransrec_kernel,
        out_shape=jax.ShapeDtypeStruct((1, B), jnp.float32),
        grid_spec=pltpu.PrefetchScalarGridSpec(
            num_scalar_prefetch=0,
            grid=(B // tile_b,),
            in_specs=[
                pl.BlockSpec((D, tile_b), lambda i: (0, i)),   # user (+gt) rows
                pl.BlockSpec((D, tile_b), lambda i: (0, i)),   # last item rows
                pl.BlockSpec((D, tile_b), lambda i: (0, i)),   # pre item rows
                pl.BlockSpec((1, tile_b), lambda i: (0, i)),   # pre item bias (lane-dense)
            ],
            out_specs=pl.BlockSpec((1, tile_b), lambda i: (0, i)),   # lane-dense output
        ),
        compiler_params=pltpu.CompilerParams(dimension_semantics=("parallel",)),
    )(user_rows, last_rows, pre_rows, pre_bias_row)
    return out[0]   # hat_y, shape (B,)


def htransrec_forward(params, user_ids, last_items, pre_items, *,
                      tile_b=None, stream_bf16=False):
    """Full forward: id gathers (plain-JAX glue, lane-major) + Pallas kernel."""
    user_t = params["user_embeddings_t"]      # (D, num_users)  lane-major table
    item_t = params["item_embeddings_t"]      # (D, num_items)  lane-major table
    gt = params["global_transition"]          # (1, D)
    bias_t = params["item_biases_t"]          # (1, num_items)
    D = item_t.shape[0]

    # Fold the global transition into the user table once (amortized over the
    # whole batch; in a real model fold it at parameter-update time instead).
    user_gt_t = user_t + gt.reshape(D, 1)

    # Gathers along the LAST axis -> lane-major (D, B) activations, no transposes.
    # TODO(synk): for large tables with D >= 128, fuse this gather into the kernel
    # via scalar-prefetched ids + per-row DMAs (memory_space=pl.ANY) to drop the
    # intermediate HBM pass entirely.
    u = jnp.take(user_gt_t, user_ids, axis=1)     # (D, B)
    l = jnp.take(item_t, last_items, axis=1)      # (D, B)
    p = jnp.take(item_t, pre_items, axis=1)       # (D, B)
    b = jnp.take(bias_t, pre_items, axis=1)       # (1, B)  stays f32

    if stream_bf16:
        # Halves the dominant HBM read traffic; kernel upcasts to f32 before the
        # reductions.  Off by default: acosh near 1 amplifies input error.
        u = u.astype(jnp.bfloat16)
        l = l.astype(jnp.bfloat16)
        p = p.astype(jnp.bfloat16)

    return htransrec_scores(u, l, p, b, tile_b=tile_b)


# ---------------- pure-JAX reference (mirrors the PyTorch math) ----------------

def _exp_map_zero_ref(v):
    v = v + EPS
    n = jnp.sqrt(jnp.sum(v * v, axis=-1, keepdims=True))
    r = jnp.tanh(n) * v / n
    rn = jnp.sqrt(jnp.sum(r * r, axis=-1, keepdims=True))
    scale = jnp.where(rn > MAXNORM, MAXNORM / (rn + RENORM_EPS), 1.0)
    return r * scale


def _hyper_distance_ref(x, y):
    nx = jnp.clip(jnp.sum(x * x, axis=-1), 0.0, CLAMP_MAX)
    ny = jnp.clip(jnp.sum(y * y, axis=-1), 0.0, CLAMP_MAX)
    d = jnp.sum((x - y) ** 2, axis=-1)
    arg = 1.0 + 2.0 * d / ((1.0 - nx) * (1.0 - ny))
    return jnp.log(arg + jnp.sqrt(jnp.maximum(arg * arg - 1.0, 0.0)))


def reference_forward(user_embs, last_embs, pre_embs, pre_bias, global_transition):
    t = _exp_map_zero_ref(user_embs + global_transition + last_embs)
    p = _exp_map_zero_ref(pre_embs)
    return -_hyper_distance_ref(t, p) + pre_bias[:, 0]


if __name__ == "__main__":
    num_users, num_items, embed_dim = 10, 20, 32
    batch = 256              # auto tile_b -> 128, grid of 2 "parallel" steps

    key = jax.random.PRNGKey(0)
    k_item, k_gt, k_u, k_l, k_p = jax.random.split(key, 5)

    # reset_parameters(): user embeddings zeros, item biases zeros,
    # item embeddings uniform, global_transition uniform.
    user_embeddings = jnp.zeros((num_users, embed_dim), jnp.float32)
    item_embeddings = jax.random.uniform(k_item, (num_items, embed_dim),
                                         jnp.float32, -0.5, 0.5)
    global_transition = jax.random.uniform(k_gt, (1, embed_dim),
                                           jnp.float32, -0.5, 0.5)
    item_biases = jnp.zeros((num_items, 1), jnp.float32)

    # Parameters stored in lane-major (D, num_rows) layout — a one-time init
    # cost so the per-batch forward never transposes anything.
    params = dict(
        user_embeddings_t=user_embeddings.T,                 # (D, num_users)
        item_embeddings_t=item_embeddings.T,                 # (D, num_items)
        global_transition=global_transition,                 # (1, D)
        item_biases_t=item_biases.reshape(1, num_items),     # (1, num_items)
    )

    # Inputs (indices).
    user_ids = jax.random.randint(k_u, (batch,), 0, num_users)
    last_items = jax.random.randint(k_l, (batch,), 0, num_items)
    pre_items = jax.random.randint(k_p, (batch,), 0, num_items)

    hat_y = htransrec_forward(params, user_ids, last_items, pre_items)
    hat_y = jax.block_until_ready(hat_y)

    # Reference path (row-major gathers, mirrors the PyTorch module exactly).
    user_embs = user_embeddings[user_ids]          # (B, D)
    last_item_embs = item_embeddings[last_items]   # (B, D)
    pre_item_embs = item_embeddings[pre_items]     # (B, D)
    pre_item_bias = item_biases[pre_items]         # (B, 1)
    ref = reference_forward(user_embs, last_item_embs, pre_item_embs,
                            pre_item_bias, global_transition)

    assert hat_y.shape == (batch,)
    assert jnp.allclose(hat_y, ref, atol=1e-4, rtol=1e-4), (hat_y, ref)

    print("KERNEL_OK")
</pallas_src>

<mosaic_0001>
module attributes {stable_mosaic.version = 11 : i64} {
  func.func @htransrec_kernel(%arg0: i32, %arg1: memref<32x128xf32, #tpu.memory_space<vmem>>, %arg2: memref<32x128xf32, #tpu.memory_space<vmem>>, %arg3: memref<32x128xf32, #tpu.memory_space<vmem>>, %arg4: memref<1x128xf32, #tpu.memory_space<vmem>>, %arg5: memref<1x128xf32, #tpu.memory_space<vmem>>) attributes {dimension_semantics = [#tpu.dimension_semantics<parallel>], iteration_bounds = array<i64: 2>, scalar_prefetch = 0 : i64, scratch_operands = 0 : i64, tpu.core_type = #tpu.core_type<tc>, window_params = [{transform_indices = @transform_0, window_bounds = array<i64: 32, 128>}, {transform_indices = @transform_1, window_bounds = array<i64: 32, 128>}, {transform_indices = @transform_2, window_bounds = array<i64: 32, 128>}, {transform_indices = @transform_3, window_bounds = array<i64: 1, 128>}, {transform_indices = @transform_4, window_bounds = array<i64: 1, 128>}]} {
    %c0 = arith.constant 0 : index
    %c0_0 = arith.constant 0 : index
    %0 = vector.load %arg1[%c0, %c0_0] : memref<32x128xf32, #tpu.memory_space<vmem>>, vector<32x128xf32>
    %c0_1 = arith.constant 0 : index
    %c0_2 = arith.constant 0 : index
    %1 = vector.load %arg2[%c0_1, %c0_2] : memref<32x128xf32, #tpu.memory_space<vmem>>, vector<32x128xf32>
    %2 = arith.addf %0, %1 : vector<32x128xf32>
    %cst = arith.constant 9.99999974E-6 : f32
    %3 = vector.broadcast %cst : f32 to vector<32x128xf32>
    %4 = arith.addf %2, %3 : vector<32x128xf32>
    %c0_3 = arith.constant 0 : index
    %c0_4 = arith.constant 0 : index
    %5 = vector.load %arg3[%c0_3, %c0_4] : memref<32x128xf32, #tpu.memory_space<vmem>>, vector<32x128xf32>
    %cst_5 = arith.constant 9.99999974E-6 : f32
    %6 = vector.broadcast %cst_5 : f32 to vector<32x128xf32>
    %7 = arith.addf %5, %6 : vector<32x128xf32>
    %8 = arith.mulf %4, %4 : vector<32x128xf32>
    %cst_6 = arith.constant dense<0.000000e+00> : vector<128xf32>
    %9 = vector.multi_reduction <add>, %8, %cst_6 [0] : vector<32x128xf32> to vector<128xf32>
    %10 = vector.shape_cast %9 : vector<128xf32> to vector<1x128xf32>
    %11 = arith.mulf %7, %7 : vector<32x128xf32>
    %cst_7 = arith.constant dense<0.000000e+00> : vector<128xf32>
    %12 = vector.multi_reduction <add>, %11, %cst_7 [0] : vector<32x128xf32> to vector<128xf32>
    %13 = vector.shape_cast %12 : vector<128xf32> to vector<1x128xf32>
    %14 = math.sqrt %10 : vector<1x128xf32>
    %cst_8 = arith.constant 1.000000e-30 : f32
    %15 = vector.broadcast %cst_8 : f32 to vector<1x128xf32>
    %16 = arith.maximumf %14, %15 : vector<1x128xf32>
    %17 = math.sqrt %13 : vector<1x128xf32>
    %cst_9 = arith.constant 1.000000e-30 : f32
    %18 = vector.broadcast %cst_9 : f32 to vector<1x128xf32>
    %19 = arith.maximumf %17, %18 : vector<1x128xf32>
    %20 = math.tanh %16 : vector<1x128xf32>
    %21 = math.tanh %19 : vector<1x128xf32>
    %cst_10 = arith.constant 0.999989986 : f32
    %22 = vector.broadcast %cst_10 : f32 to vector<1x128xf32>
    %23 = arith.cmpf ogt, %20, %22 : vector<1x128xf32>
    %cst_11 = arith.constant 1.000000e-07 : f32
    %24 = vector.broadcast %cst_11 : f32 to vector<1x128xf32>
    %25 = arith.addf %20, %24 : vector<1x128xf32>
    %cst_12 = arith.constant 0.999989986 : f32
    %26 = vector.broadcast %cst_12 : f32 to vector<1x128xf32>
    %27 = arith.divf %26, %25 : vector<1x128xf32>
    %cst_13 = arith.constant 1.000000e+00 : f32
    %28 = vector.broadcast %cst_13 : f32 to vector<1x128xf32>
    %29 = arith.select %23, %27, %28 : vector<1x128xi1>, vector<1x128xf32>
    %cst_14 = arith.constant 0.999989986 : f32
    %30 = vector.broadcast %cst_14 : f32 to vector<1x128xf32>
    %31 = arith.cmpf ogt, %21, %30 : vector<1x128xf32>
    %cst_15 = arith.constant 1.000000e-07 : f32
    %32 = vector.broadcast %cst_15 : f32 to vector<1x128xf32>
    %33 = arith.addf %21, %32 : vector<1x128xf32>
    %cst_16 = arith.constant 0.999989986 : f32
    %34 = vector.broadcast %cst_16 : f32 to vector<1x128xf32>
    %35 = arith.divf %34, %33 : vector<1x128xf32>
    %cst_17 = arith.constant 1.000000e+00 : f32
    %36 = vector.broadcast %cst_17 : f32 to vector<1x128xf32>
    %37 = arith.select %31, %35, %36 : vector<1x128xi1>, vector<1x128xf32>
    %38 = arith.mulf %29, %20 : vector<1x128xf32>
    %39 = arith.mulf %37, %21 : vector<1x128xf32>
    %40 = arith.divf %38, %16 : vector<1x128xf32>
    %41 = arith.divf %39, %19 : vector<1x128xf32>
    %42 = vector.broadcast %40 : vector<1x128xf32> to vector<32x128xf32>
    %43 = arith.mulf %42, %4 : vector<32x128xf32>
    %44 = vector.broadcast %41 : vector<1x128xf32> to vector<32x128xf32>
    %45 = arith.mulf %44, %7 : vector<32x128xf32>
    %46 = arith.subf %43, %45 : vector<32x128xf32>
    %47 = arith.mulf %46, %46 : vector<32x128xf32>
    %cst_18 = arith.constant dense<0.000000e+00> : vector<128xf32>
    %48 = vector.multi_reduction <add>, %47, %cst_18 [0] : vector<32x128xf32> to vector<128xf32>
    %49 = vector.shape_cast %48 : vector<128xf32> to vector<1x128xf32>
    %50 = arith.mulf %38, %38 : vector<1x128xf32>
    %cst_19 = arith.constant 0.999998986 : f32
    %51 = vector.broadcast %cst_19 : f32 to vector<1x128xf32>
    %52 = arith.minimumf %50, %51 : vector<1x128xf32>
    %53 = arith.mulf %39, %39 : vector<1x128xf32>
    %cst_20 = arith.constant 0.999998986 : f32
    %54 = vector.broadcast %cst_20 : f32 to vector<1x128xf32>
    %55 = arith.minimumf %53, %54 : vector<1x128xf32>
    %cst_21 = arith.constant 2.000000e+00 : f32
    %56 = vector.broadcast %cst_21 : f32 to vector<1x128xf32>
    %57 = arith.mulf %56, %49 : vector<1x128xf32>
    %cst_22 = arith.constant 1.000000e+00 : f32
    %58 = vector.broadcast %cst_22 : f32 to vector<1x128xf32>
    %59 = arith.subf %58, %52 : vector<1x128xf32>
    %cst_23 = arith.constant 1.000000e+00 : f32
    %60 = vector.broadcast %cst_23 : f32 to vector<1x128xf32>
    %61 = arith.subf %60, %55 : vector<1x128xf32>
    %62 = arith.mulf %59, %61 : vector<1x128xf32>
    %63 = arith.divf %57, %62 : vector<1x128xf32>
    %cst_24 = arith.constant 1.000000e+00 : f32
    %64 = vector.broadcast %cst_24 : f32 to vector<1x128xf32>
    %65 = arith.addf %64, %63 : vector<1x128xf32>
    %66 = arith.mulf %65, %65 : vector<1x128xf32>
    %cst_25 = arith.constant 1.000000e+00 : f32
    %67 = vector.broadcast %cst_25 : f32 to vector<1x128xf32>
    %68 = arith.subf %66, %67 : vector<1x128xf32>
    %cst_26 = arith.constant 0.000000e+00 : f32
    %69 = vector.broadcast %cst_26 : f32 to vector<1x128xf32>
    %70 = arith.maximumf %68, %69 : vector<1x128xf32>
    %71 = math.sqrt %70 : vector<1x128xf32>
    %72 = arith.addf %65, %71 : vector<1x128xf32>
    %73 = math.log %72 : vector<1x128xf32>
    %c0_27 = arith.constant 0 : index
    %c0_28 = arith.constant 0 : index
    %74 = vector.load %arg4[%c0_27, %c0_28] : memref<1x128xf32, #tpu.memory_space<vmem>>, vector<1x128xf32>
    %75 = arith.subf %74, %73 : vector<1x128xf32>
    %c0_29 = arith.constant 0 : index
    %c0_30 = arith.constant 0 : index
    %76 = vector.load %arg5[%c0_29, %c0_30] : memref<1x128xf32, #tpu.memory_space<vmem>>, vector<1x128xf32>
    tpu.vector_store %arg5[%c0_29, %c0_30], %75 {strides = array<i32>} : memref<1x128xf32, #tpu.memory_space<vmem>>, vector<1x128xf32>,
    return
  }
  func.func @transform_0(%arg0: i32) -> (i32, i32) {
    %c0_i32 = arith.constant 0 : i32
    %c0_i32_0 = arith.constant 0 : i32
    return %c0_i32, %arg0 : i32, i32
  }
  func.func @transform_1(%arg0: i32) -> (i32, i32) {
    %c0_i32 = arith.constant 0 : i32
    %c0_i32_0 = arith.constant 0 : i32
    return %c0_i32, %arg0 : i32, i32
  }
  func.func @transform_2(%arg0: i32) -> (i32, i32) {
    %c0_i32 = arith.constant 0 : i32
    %c0_i32_0 = arith.constant 0 : i32
    return %c0_i32, %arg0 : i32, i32
  }
  func.func @transform_3(%arg0: i32) -> (i32, i32) {
    %c0_i32 = arith.constant 0 : i32
    %c0_i32_0 = arith.constant 0 : i32
    return %c0_i32, %arg0 : i32, i32
  }
  func.func @transform_4(%arg0: i32) -> (i32, i32) {
    %c0_i32 = arith.constant 0 : i32
    %c0_i32_0 = arith.constant 0 : i32
    return %c0_i32, %arg0 : i32, i32
  }
}

</mosaic_0001>

<llo_original>
// kernel: tpu_custom_call.1
$region0: #{tpu_custom_call.1}
  #allocation0 [shape = 'u32[]', space=smem, size = 0x4, offset = 0x4, fixed_abs, tag = 'smem constant byte address 0x4 - core index']
  #allocation1 [shape = 'u32[144,128]{1,0:T(1,128)}', space=vmem, size = 0x12000, scoped, tag = 'internal scratch']
  %s0 = inlined_call_operand.hbm [shape: f32[32,256], index: 0, kind: input, shape index: {}]
  %s1 = inlined_call_operand.hbm [shape: f32[32,256], index: 1, kind: input, shape index: {}]
  %s2 = inlined_call_operand.hbm [shape: f32[32,256], index: 2, kind: input, shape index: {}]
  %s3 = inlined_call_operand.vmem [shape: f32[1,256], index: 3, kind: input, shape index: {}]
  %s4 = inlined_call_operand.hbm [shape: f32[1,256], index: 4, kind: output, shape index: {}]
  %s5 = sld [smem:[#allocation0]]
  $region61: #{tpu_custom_call.1} parent=0
    _
  %s7 = ssub.s32 1, %s5
  %s8 = scalar_select 0, %s7, %s5
  $region1: #{tpu_custom_call.1} parent=0
    #allocation2 [shape = 'u8[32768]{0}', space=vmem, size = 0x8000, scoped, tag = 'input window, operand 0']
    #allocation3 [shape = 's32[2]{0}', space=sflag, size = 0x8, scoped, tag = 'scoped memory for tpu_custom_call.1']
    #allocation4 [shape = 's32[2]{0}', space=sflag, size = 0x8, scoped, tag = 'scoped memory for tpu_custom_call.1']
    #allocation5 [shape = 'u8[32768]{0}', space=vmem, size = 0x8000, scoped, tag = 'input window, operand 1']
    #allocation6 [shape = 's32[2]{0}', space=sflag, size = 0x8, scoped, tag = 'scoped memory for tpu_custom_call.1']
    #allocation7 [shape = 'u8[32768]{0}', space=vmem, size = 0x8000, scoped, tag = 'input window, operand 2']
    #allocation8 [shape = 'u8[1024]{0}', space=vmem, size = 0x400, scoped, tag = 'output window, operand 0']
    %9 = vsyncpa [#allocation3], 0
    %s10 = scalar_lea.sflag [#allocation3], 1
    %11 = vsyncpa %s10, 0
    %12 = vsyncpa [#allocation6], 0
    %s13 = scalar_lea.sflag [#allocation6], 1
    %14 = vsyncpa %s13, 0
    %15 = vsyncpa [#allocation4], 0
    %s16 = scalar_lea.sflag [#allocation4], 1
    %17 = vsyncpa %s16, 0
    loop: start=0, step=1, limit=4
    $region2: #{tpu_custom_call.1} parent=1 // loop_pre_header
      _
    $region3: #{tpu_custom_call.1} parent=1 // loop_header
      %s19 = sphi 0, %s23
      %p20 = scmp.ge.s32.totalorder %s19, 4
      %s29 = sphi 0, %s31
      %s32 = sphi 0, %s29
      %s33 = sphi 0, %s32
      %s49 = sphi 0, %s33
      %s55 = sphi 0, %s57
      %s58 = sphi 0, %s55
      %s59 = sphi 0, %s58
      %s75 = sphi 0, %s59
      %s81 = sphi 0, %s83
      %s84 = sphi 0, %s81
      %s85 = sphi 0, %s84
      %s101 = sphi 0, %s85
      %s107 = sphi 0, %s109
      %s110 = sphi 0, %s107
      %s111 = sphi 0, %s110
      %s127 = sphi 0, %s111
      %s133 = sphi 0, %s135
      %s136 = sphi 0, %s133
      %s137 = sphi 0, %s136
      %s153 = sphi 0, %s137
    $region4: #{tpu_custom_call.1} parent=1 // loop_header_branch
      %22 = sbr.rel (%p20) target = $region8
    $region5: #{tpu_custom_call.1} parent=1 // loop_body
      %s24 = ssub.s32 %s19, 1
      %s25 = ssub.s32 %s19, 2
      %s26 = sadd.s32 %s19, 1
      %s27 = ssub.s32 %s19, %s26
      %p28 = scmp.eq.s32.totalorder %s27, 0
      %s30 = sadd.s32 %s29, 1
      %s31 = scalar_select %p28, %s29, %s30
      %p34 = pneg %p28
      %p35 = scmp.eq.s32.totalorder %s19, 1
      %p36 = por %p34, %p35
      %p37 = scmp.ne.s32.totalorder %s29, %s32
      %p38 = scmp.eq.s32.totalorder %s19, 0
      %p39 = por %p37, %p38
      %p40 = scmp.ne.s32.totalorder %s29, %s32
      %p41 = scmp.eq.s32.totalorder %s24, 1
      %p42 = por %p40, %p41
      %p43 = scmp.ne.s32.totalorder %s32, %s33
      %p44 = scmp.eq.s32.totalorder %s24, 0
      %p45 = por %p43, %p44
      %p46 = scmp.ne.s32.totalorder %s32, %s33
      %p47 = scmp.eq.s32.totalorder %s25, 1
      %p48 = por %p46, %p47
      %p50 = scmp.ne.s32.totalorder %s33, %s49
      %p51 = scmp.eq.s32.totalorder %s25, 0
      %p52 = por %p50, %p51
      %s53 = ssub.s32 %s19, %s26
      %p54 = scmp.eq.s32.totalorder %s53, 0
      %s56 = sadd.s32 %s55, 1
      %s57 = scalar_select %p54, %s55, %s56
      %p60 = pneg %p54
      %p61 = scmp.eq.s32.totalorder %s19, 1
      %p62 = por %p60, %p61
      %p63 = scmp.ne.s32.totalorder %s55, %s58
      %p64 = scmp.eq.s32.totalorder %s19, 0
      %p65 = por %p63, %p64
      %p66 = scmp.ne.s32.totalorder %s55, %s58
      %p67 = scmp.eq.s32.totalorder %s24, 1
      %p68 = por %p66, %p67
      %p69 = scmp.ne.s32.totalorder %s58, %s59
      %p70 = scmp.eq.s32.totalorder %s24, 0
      %p71 = por %p69, %p70
      %p72 = scmp.ne.s32.totalorder %s58, %s59
      %p73 = scmp.eq.s32.totalorder %s25, 1
      %p74 = por %p72, %p73
      %p76 = scmp.ne.s32.totalorder %s59, %s75
      %p77 = scmp.eq.s32.totalorder %s25, 0
      %p78 = por %p76, %p77
      %s79 = ssub.s32 %s19, %s26
      %p80 = scmp.eq.s32.totalorder %s79, 0
      %s82 = sadd.s32 %s81, 1
      %s83 = scalar_select %p80, %s81, %s82
      %p86 = pneg %p80
      %p87 = scmp.eq.s32.totalorder %s19, 1
      %p88 = por %p86, %p87
      %p89 = scmp.ne.s32.totalorder %s81, %s84
      %p90 = scmp.eq.s32.totalorder %s19, 0
      %p91 = por %p89, %p90
      %p92 = scmp.ne.s32.totalorder %s81, %s84
      %p93 = scmp.eq.s32.totalorder %s24, 1
      %p94 = por %p92, %p93
      %p95 = scmp.ne.s32.totalorder %s84, %s85
      %p96 = scmp.eq.s32.totalorder %s24, 0
      %p97 = por %p95, %p96
      %p98 = scmp.ne.s32.totalorder %s84, %s85
      %p99 = scmp.eq.s32.totalorder %s25, 1
      %p100 = por %p98, %p99
      %p102 = scmp.ne.s32.totalorder %s85, %s101
      %p103 = scmp.eq.s32.totalorder %s25, 0
      %p104 = por %p102, %p103
      %s105 = ssub.s32 %s19, %s26
      %p106 = scmp.eq.s32.totalorder %s105, 0
      %s108 = sadd.s32 %s107, 1
      %s109 = scalar_select %p106, %s107, %s108
      %p112 = pneg %p106
      %p113 = scmp.eq.s32.totalorder %s19, 1
      %p114 = por %p112, %p113
      %p115 = scmp.ne.s32.totalorder %s107, %s110
      %p116 = scmp.eq.s32.totalorder %s19, 0
      %p117 = por %p115, %p116
      %p118 = scmp.ne.s32.totalorder %s107, %s110
      %p119 = scmp.eq.s32.totalorder %s24, 1
      %p120 = por %p118, %p119
      %p121 = scmp.ne.s32.totalorder %s110, %s111
      %p122 = scmp.eq.s32.totalorder %s24, 0
      %p123 = por %p121, %p122
      %p124 = scmp.ne.s32.totalorder %s110, %s111
      %p125 = scmp.eq.s32.totalorder %s25, 1
      %p126 = por %p124, %p125
      %p128 = scmp.ne.s32.totalorder %s111, %s127
      %p129 = scmp.eq.s32.totalorder %s25, 0
      %p130 = por %p128, %p129
      %s131 = ssub.s32 %s19, %s26
      %p132 = scmp.eq.s32.totalorder %s131, 0
      %s134 = sadd.s32 %s133, 1
      %s135 = scalar_select %p132, %s133, %s134
      %p138 = pneg %p132
      %p139 = scmp.eq.s32.totalorder %s19, 1
      %p140 = por %p138, %p139
      %p141 = scmp.ne.s32.totalorder %s133, %s136
      %p142 = scmp.eq.s32.totalorder %s19, 0
      %p143 = por %p141, %p142
      %p144 = scmp.ne.s32.totalorder %s133, %s136
      %p145 = scmp.eq.s32.totalorder %s24, 1
      %p146 = por %p144, %p145
      %p147 = scmp.ne.s32.totalorder %s136, %s137
      %p148 = scmp.eq.s32.totalorder %s24, 0
      %p149 = por %p147, %p148
      %p150 = scmp.ne.s32.totalorder %s136, %s137
      %p151 = scmp.eq.s32.totalorder %s25, 1
      %p152 = por %p150, %p151
      %p154 = scmp.ne.s32.totalorder %s137, %s153
      %p155 = scmp.eq.s32.totalorder %s25, 0
      %p156 = por %p154, %p155
      %p157 = scmp.le.s32.totalorder 1, %s19
      %p158 = scmp.lt.s32.totalorder %s19, 3
      %p159 = pnand %p157, %p158
      %p160 = pneg %p159
      // Predicated region
      $region9: #{tpu_custom_call.1} parent=5 // pred_check
        _
      $region10: #{tpu_custom_call.1} parent=5 // pred_check_branch
        %162 = sbr.rel (%p159) target = $region12
      $region11: #{tpu_custom_call.1} parent=5 // pred_region
        %s163 = ssub.s32 %s19, 1
      $region12: #{tpu_custom_call.1} parent=5 // pred_fallthru
        _
      %p164 = scmp.lt.s32.totalorder %s19, 2
      // Predicated region
      $region13: #{tpu_custom_call.1} parent=5 // pred_check
        %p165 = pneg %p164
      $region14: #{tpu_custom_call.1} parent=5 // pred_check_branch
        %167 = sbr.rel (%p165) target = $region16
      $region15: #{tpu_custom_call.1} parent=5 // pred_region
        // Predicated region
        $region17: #{tpu_custom_call.1} parent=15 // pred_check
          %p168 = pneg %p39
        $region18: #{tpu_custom_call.1} parent=15 // pred_check_branch
          %170 = sbr.rel (%p168) target = $region20
        $region19: #{tpu_custom_call.1} parent=15 // pred_region
          %s171 = sand.u32 %s29, 1
          %s172 = scalar_lea.sflag [#allocation3], %s171
          %s173 = sand.u32 %s29, 1
          %s174 = smul.addr %s173, 32
          %s175 = scalar_lea.vmem [#allocation2], %s174
          %s177 = ssub.s32 512, 512
          %178 = vsyncadd %s172, %s177
          %s179 = smul.addr %s19, 128
          %s180 = scalar_lea.hbm %s0, %s179
          %s181 = sshll.u32 %s175, 4
          %s182 = int_to_ptr.vmem [resolvable:$true] %s181
          %187 = dma.hbm_to_vmem [thread:$0]  %s180, 512, %s182, %s172, 256, 128, 8
        $region20: #{tpu_custom_call.1} parent=15 // pred_fallthru
          _
        // Predicated region
        $region21: #{tpu_custom_call.1} parent=15 // pred_check
          %p188 = pneg %p65
        $region22: #{tpu_custom_call.1} parent=15 // pred_check_branch
          %190 = sbr.rel (%p188) target = $region24
        $region23: #{tpu_custom_call.1} parent=15 // pred_region
          %s191 = sand.u32 %s19, 1
          %s192 = scalar_lea.sflag [#allocation6], %s191
          %s193 = sand.u32 %s55, 1
          %s194 = smul.addr %s193, 32
          %s195 = scalar_lea.vmem [#allocation5], %s194
          %s197 = ssub.s32 512, 512
          %198 = vsyncadd %s192, %s197
          %s199 = smul.addr %s19, 128
          %s200 = scalar_lea.hbm %s1, %s199
          %s201 = sshll.u32 %s195, 4
          %s202 = int_to_ptr.vmem [resolvable:$true] %s201
          %207 = dma.hbm_to_vmem [thread:$0]  %s200, 512, %s202, %s192, 256, 128, 8
        $region24: #{tpu_custom_call.1} parent=15 // pred_fallthru
          _
        // Predicated region
        $region25: #{tpu_custom_call.1} parent=15 // pred_check
          %p208 = pneg %p91
        $region26: #{tpu_custom_call.1} parent=15 // pred_check_branch
          %210 = sbr.rel (%p208) target = $region28
        $region27: #{tpu_custom_call.1} parent=15 // pred_region
          %s211 = sand.u32 %s19, 1
          %s212 = scalar_lea.sflag [#allocation6], %s211
          %s213 = sand.u32 %s81, 1
          %s214 = smul.addr %s213, 32
          %s215 = scalar_lea.vmem [#allocation7], %s214
          %s217 = ssub.s32 512, 512
          %218 = vsyncadd %s212, %s217
          %s219 = smul.addr %s19, 128
          %s220 = scalar_lea.hbm %s2, %s219
          %s221 = sshll.u32 %s215, 4
          %s222 = int_to_ptr.vmem [resolvable:$true] %s221
          %227 = dma.hbm_to_vmem [thread:$0]  %s220, 512, %s222, %s212, 256, 128, 8
        $region28: #{tpu_custom_call.1} parent=15 // pred_fallthru
          _
        // Predicated region
        $region29: #{tpu_custom_call.1} parent=15 // pred_check
          %p228 = pneg %p117
        $region30: #{tpu_custom_call.1} parent=15 // pred_check_branch
          %230 = sbr.rel (%p228) target = $region32
        $region31: #{tpu_custom_call.1} parent=15 // pred_region
          %p231 = scmp.lt.s32.totalorder %s19, 1
          %s232 = scalar_select %p231, %s19, 1
          %s233 = scalar_lea.vmem %s3, %s232
        $region32: #{tpu_custom_call.1} parent=15 // pred_fallthru
          _
      $region16: #{tpu_custom_call.1} parent=5 // pred_fallthru
        _
      %p234 = scmp.le.s32.totalorder 1, %s19
      %p235 = scmp.lt.s32.totalorder %s19, 3
      %p236 = pnand %p234, %p235
      %p237 = pneg %p236
      // Predicated region
      $region33: #{tpu_custom_call.1} parent=5 // pred_check
        _
      $region34: #{tpu_custom_call.1} parent=5 // pred_check_branch
        %239 = sbr.rel (%p236) target = $region36
      $region35: #{tpu_custom_call.1} parent=5 // pred_region
        %s240 = ssub.s32 %s19, 1
        %s241 = sand.u32 %s32, 1
        %s242 = scalar_lea.sflag [#allocation3], %s241
        %s243 = sand.u32 %s32, 1
        %s244 = smul.addr %s243, 32
        %s245 = scalar_lea.vmem [#allocation2], %s244
        // Predicated region
        $region37: #{tpu_custom_call.1} parent=35 // pred_check
          %p246 = pneg %p45
        $region38: #{tpu_custom_call.1} parent=35 // pred_check_branch
          %248 = sbr.rel (%p246) target = $region40
        $region39: #{tpu_custom_call.1} parent=35 // pred_region
          %249 = dma.done %s242, 512
        $region40: #{tpu_custom_call.1} parent=35 // pred_fallthru
          _
        %s250 = sand.u32 %s24, 1
        %s251 = scalar_lea.sflag [#allocation6], %s250
        %s252 = sand.u32 %s58, 1
        %s253 = smul.addr %s252, 32
        %s254 = scalar_lea.vmem [#allocation5], %s253
        // Predicated region
        $region41: #{tpu_custom_call.1} parent=35 // pred_check
          %p255 = pneg %p71
        $region42: #{tpu_custom_call.1} parent=35 // pred_check_branch
          %257 = sbr.rel (%p255) target = $region44
        $region43: #{tpu_custom_call.1} parent=35 // pred_region
          %258 = dma.done %s251, 512
        $region44: #{tpu_custom_call.1} parent=35 // pred_fallthru
          _
        %s259 = sand.u32 %s24, 1
        %s260 = scalar_lea.sflag [#allocation6], %s259
        %s261 = sand.u32 %s84, 1
        %s262 = smul.addr %s261, 32
        %s263 = scalar_lea.vmem [#allocation7], %s262
        // Predicated region
        $region45: #{tpu_custom_call.1} parent=35 // pred_check
          %p264 = pneg %p97
        $region46: #{tpu_custom_call.1} parent=35 // pred_check_branch
          %266 = sbr.rel (%p264) target = $region48
        $region47: #{tpu_custom_call.1} parent=35 // pred_region
          %267 = dma.done %s260, 512
        $region48: #{tpu_custom_call.1} parent=35 // pred_fallthru
          _
        %s268 = sand.u32 %s32, 1
        %s269 = scalar_lea.sflag [#allocation3], %s268
        %s270 = sand.u32 %s32, 1
        %s271 = smul.addr %s270, 32
        %s272 = scalar_lea.vmem [#allocation2], %s271
        %p273 = pneg %p45
        %p274 = pneg %p42
        %s275 = sand.u32 %s24, 1
        %s276 = scalar_lea.sflag [#allocation6], %s275
        %s277 = sand.u32 %s58, 1
        %s278 = smul.addr %s277, 32
        %s279 = scalar_lea.vmem [#allocation5], %s278
        %p280 = pneg %p71
        %p281 = pneg %p68
        %s282 = sand.u32 %s24, 1
        %s283 = scalar_lea.sflag [#allocation6], %s282
        %s284 = sand.u32 %s84, 1
        %s285 = smul.addr %s284, 32
        %s286 = scalar_lea.vmem [#allocation7], %s285
        %p287 = pneg %p97
        %p288 = pneg %p94
        %p289 = scmp.lt.s32.totalorder %s24, 1
        %s290 = scalar_select %p289, %s24, 1
        %s291 = scalar_lea.vmem %s3, %s290
        %p292 = pneg %p123
        %p293 = pneg %p120
        %p294 = pneg %p149
        %p295 = pneg %p146
        %s296 = sand.u32 %s136, 1
        %s297 = scalar_lea.sflag [#allocation4], %s296
        %s298 = sand.u32 %s136, 1
        %s299 = scalar_lea.vmem [#allocation8], %s298
        %p300 = scmp.lt.s32.totalorder %s24, 1
        %s301 = scalar_select %p300, %s24, 1
        %s302 = scalar_lea.vmem %s3, %s301
        %v303 = vld [vmem:[%s245] sm:$0xff]
        %v304 = vld [vmem:[%s245 + $0x8] sm:$0xff]
        %v305 = vld [vmem:[%s245 + $0x10] sm:$0xff]
        %v306 = vld [vmem:[%s245 + $0x18] sm:$0xff]
        %v307 = vld [vmem:[%s254] sm:$0xff]
        %v308 = vld [vmem:[%s254 + $0x8] sm:$0xff]
        %v309 = vld [vmem:[%s254 + $0x10] sm:$0xff]
        %v310 = vld [vmem:[%s254 + $0x18] sm:$0xff]
        %v311 = vadd.f32 %v303, %v307
        %v312 = vadd.f32 %v304, %v308
        %v313 = vadd.f32 %v305, %v309
        %v314 = vadd.f32 %v306, %v310
        %v315 = vadd.f32 %v311, 1e-05
        %v316 = vadd.f32 %v312, 1e-05
        %v317 = vadd.f32 %v313, 1e-05
        %v318 = vadd.f32 %v314, 1e-05
        %v319 = vld [vmem:[%s263] sm:$0xff]
        %v320 = vld [vmem:[%s263 + $0x8] sm:$0xff]
        %v321 = vld [vmem:[%s263 + $0x10] sm:$0xff]
        %v322 = vld [vmem:[%s263 + $0x18] sm:$0xff]
        %v323 = vadd.f32 %v319, 1e-05
        %v324 = vadd.f32 %v320, 1e-05
        %v325 = vadd.f32 %v321, 1e-05
        %v326 = vadd.f32 %v322, 1e-05
        %v327 = vmul.f32 %v315, %v315
        %v328 = vmul.f32 %v316, %v316
        %v329 = vmul.f32 %v317, %v317
        %v330 = vmul.f32 %v318, %v318
        %v331 = vadd.f32 %v327, %v328
        %v332 = vadd.f32 %v331, %v329
        %v333 = vadd.f32 %v332, %v330
        %v334 = vrot.slane %v333, 4
        %v335 = vadd.f32 %v333, %v334
        %v336 = vrot.slane %v335, 2
        %v337 = vadd.f32 %v335, %v336
        %v338 = vrot.slane %v337, 1
        %v339 = vadd.f32 %v337, %v338
        %v340 = vmul.f32 %v323, %v323
        %v341 = vmul.f32 %v324, %v324
        %v342 = vmul.f32 %v325, %v325
        %v343 = vmul.f32 %v326, %v326
        %v344 = vadd.f32 %v340, %v341
        %v345 = vadd.f32 %v344, %v342
        %v346 = vadd.f32 %v345, %v343
        %v347 = vrot.slane %v346, 4
        %v348 = vadd.f32 %v346, %v347
        %v349 = vrot.slane %v348, 2
        %v350 = vadd.f32 %v348, %v349
        %v351 = vrot.slane %v350, 1
        %v352 = vadd.f32 %v350, %v351
        %v353 = vrsqrt.pop %v339
        %v354 = vmul.f32 %v339, %v353
        %vm355 = vcmp.eq.f32.partialorder %v339, inf
        %v356 = vsel %vm355, %v339, %v354
        %vm357 = vcmp.eq.f32.partialorder %v339, 0.0
        %v358 = vand.u32 %v339, 2147483648
        %v359 = vsel %vm357, %v358, %v356
        %v360 = vmax.f32 %v359, 1e-30
        %v361 = vrsqrt.pop %v352
        %v362 = vmul.f32 %v352, %v361
        %vm363 = vcmp.eq.f32.partialorder %v352, inf
        %v364 = vsel %vm363, %v352, %v362
        %vm365 = vcmp.eq.f32.partialorder %v352, 0.0
        %v366 = vand.u32 %v352, 2147483648
        %v367 = vsel %vm365, %v366, %v364
        %v368 = vmax.f32 %v367, 1e-30
        %v369 = vtanh.pop %v360
        %v370 = vtanh.pop %v368
        %vm371 = vcmp.gt.f32.partialorder %v369, 0.99999
        %v372 = vadd.f32 %v369, 1e-07
        %v373 = vrcp.pop %v372
        %v374 = vmul.f32 0.99999, %v373
        %v375 = vsel %vm371, %v374, 1.0
        %vm376 = vcmp.gt.f32.partialorder %v370, 0.99999
        %v377 = vadd.f32 %v370, 1e-07
        %v378 = vrcp.pop %v377
        %v379 = vmul.f32 0.99999, %v378
        %v380 = vsel %vm376, %v379, 1.0
        %v381 = vmul.f32 %v375, %v369
        %v382 = vmul.f32 %v380, %v370
        %v383 = vrcp.pop %v360
        %v384 = vmul.f32 %v381, %v383
        %v385 = vrcp.pop %v368
        %v386 = vmul.f32 %v382, %v385
        %v387 = vmul.f32 %v384, %v315
        %v388 = vmul.f32 %v384, %v316
        %v389 = vmul.f32 %v384, %v317
        %v390 = vmul.f32 %v384, %v318
        %v391 = vmul.f32 %v386, %v323
        %v392 = vmul.f32 %v386, %v324
        %v393 = vmul.f32 %v386, %v325
        %v394 = vmul.f32 %v386, %v326
        %v395 = vsub.f32 %v387, %v391
        %v396 = vsub.f32 %v388, %v392
        %v397 = vsub.f32 %v389, %v393
        %v398 = vsub.f32 %v390, %v394
        %v399 = vmul.f32 %v395, %v395
        %v400 = vmul.f32 %v396, %v396
        %v401 = vmul.f32 %v397, %v397
        %v402 = vmul.f32 %v398, %v398
        %v403 = vadd.f32 %v399, %v400
        %v404 = vadd.f32 %v403, %v401
        %v405 = vadd.f32 %v404, %v402
        %v406 = vrot.slane %v405, 4
        %v407 = vadd.f32 %v405, %v406
        %v408 = vrot.slane %v407, 2
        %v409 = vadd.f32 %v407, %v408
        %v410 = vrot.slane %v409, 1
        %v411 = vadd.f32 %v409, %v410
        %v412 = vmul.f32 %v381, %v381
        %v413 = vmin.f32 %v412, 0.999999
        %v414 = vmul.f32 %v382, %v382
        %v415 = vmin.f32 %v414, 0.999999
        %v416 = vmul.f32 %v411, 2.0
        %v417 = vsub.f32 1.0, %v413
        %v418 = vsub.f32 1.0, %v415
        %v419 = vmul.f32 %v417, %v418
        %v420 = vrcp.pop %v419
        %v421 = vmul.f32 %v416, %v420
        %v422 = vadd.f32 %v421, 1.0
        %v423 = vmul.f32 %v422, %v422
        %v424 = vsub.f32 %v423, 1.0
        %v425 = vmax.f32 %v424, 0.0
        %v426 = vrsqrt.pop %v425
        %v427 = vmul.f32 %v425, %v426
        %vm428 = vcmp.eq.f32.partialorder %v425, inf
        %v429 = vsel %vm428, %v425, %v427
        %vm430 = vcmp.eq.f32.partialorder %v425, 0.0
        %v431 = vand.u32 %v425, 2147483648
        %v432 = vsel %vm430, %v431, %v429
        %v433 = vadd.f32 %v422, %v432
        %v434 = vlog2.pop %v433
        %v435 = vmul.f32 %v434, 0.6931472
        %v436 = vld [vmem:[%s302] sm:$0x1]
        %v437 = vsub.f32 %v436, %v435
        %438 = vst [vmem:[%s299] sm:$0x1] %v437
        %s439 = sand.u32 %s136, 1
        %s440 = scalar_lea.sflag [#allocation4], %s439
        %s441 = sand.u32 %s136, 1
        %s442 = scalar_lea.vmem [#allocation8], %s441
        // Predicated region
        $region49: #{tpu_custom_call.1} parent=35 // pred_check
          %p443 = pneg %p146
        $region50: #{tpu_custom_call.1} parent=35 // pred_check_branch
          %445 = sbr.rel (%p443) target = $region52
        $region51: #{tpu_custom_call.1} parent=35 // pred_region
          %s447 = ssub.s32 16, 16
          %448 = vsyncadd %s440, %s447
          %s449 = smul.addr %s24, 16
          %s450 = scalar_lea.hbm %s4, %s449
          %s452 = sshll.u32 %s442, 4
          %s453 = int_to_ptr.vmem [resolvable:$true] %s452
          %455 = dma.vmem_to_hbm [thread:$0]  %s453, 16, %s450, %s440
        $region52: #{tpu_custom_call.1} parent=35 // pred_fallthru
          _
      $region36: #{tpu_custom_call.1} parent=5 // pred_fallthru
        _
      %p456 = scmp.le.s32.totalorder 2, %s19
      // Predicated region
      $region53: #{tpu_custom_call.1} parent=5 // pred_check
        %p457 = pneg %p456
      $region54: #{tpu_custom_call.1} parent=5 // pred_check_branch
        %459 = sbr.rel (%p457) target = $region56
      $region55: #{tpu_custom_call.1} parent=5 // pred_region
        %s460 = ssub.s32 %s19, 2
        // Predicated region
        $region57: #{tpu_custom_call.1} parent=55 // pred_check
          %p461 = pneg %p152
        $region58: #{tpu_custom_call.1} parent=55 // pred_check_branch
          %463 = sbr.rel (%p461) target = $region60
        $region59: #{tpu_custom_call.1} parent=55 // pred_region
          %s464 = sand.u32 %s137, 1
          %s465 = scalar_lea.sflag [#allocation4], %s464
          %s466 = sand.u32 %s137, 1
          %s467 = scalar_lea.vmem [#allocation8], %s466
          %468 = dma.done %s465, 16
        $region60: #{tpu_custom_call.1} parent=55 // pred_fallthru
          _
      $region56: #{tpu_custom_call.1} parent=5 // pred_fallthru
        _
    $region6: #{tpu_custom_call.1} parent=1 // loop_footer
      %s23 = sadd.s32 1, %s19
    $region7: #{tpu_custom_call.1} parent=1 // loop_footer_branch
      %18 = sbr.rel target = $region3
    $region8: #{tpu_custom_call.1} parent=1 // loop_exit
      _
    %469 = vsyncpa [#allocation3], 1
    %s470 = scalar_lea.sflag [#allocation3], 1
    %471 = vsyncpa %s470, 1
    %472 = vsyncpa [#allocation6], 1
    %s473 = scalar_lea.sflag [#allocation6], 1
    %474 = vsyncpa %s473, 1
    %475 = vsyncpa [#allocation4], 1
    %s476 = scalar_lea.sflag [#allocation4], 1
    %477 = vsyncpa %s476, 1

</llo_original>
